<compile_context>
chip_gen: v7x
topology: tpu7x:2x2x1
jax: 0.10.0
libtpu: 0.0.40
codegen_flags: <defaults>
</compile_context>

<pallas_src>
import functools

import jax
import jax.numpy as jnp
from jax.experimental import pallas as pl
from jax.experimental.pallas import tpu as pltpu  # noqa: F401  (toy sizes need no TPU-specific params)


# ----------------------------- in-kernel helpers -----------------------------

_SQRT_HALF = 0.7071067811865476


def _erf(x):
    # Abramowitz & Stegun 7.1.26 rational approximation, |abs err| < 1.5e-7 (float32 level).
    p = 0.3275911
    a1, a2, a3, a4, a5 = 0.254829592, -0.284496736, 1.421413741, -1.453152027, 1.061405429
    sgn = jnp.where(x >= 0.0, 1.0, -1.0)
    z = jnp.abs(x)
    t = 1.0 / (1.0 + p * z)
    poly = ((((a5 * t + a4) * t + a3) * t + a2) * t + a1) * t
    return sgn * (1.0 - poly * jnp.exp(-z * z))


def _gelu_exact(x):
    # TODO(synk): exact (erf) GELU implemented with a float32-accurate polynomial erf
    # instead of lax.erf to keep Mosaic lowering dependency-free.
    return 0.5 * x * (1.0 + _erf(x * _SQRT_HALF))


def _layernorm(x, g, b, eps):
    mean = jnp.mean(x, axis=-1, keepdims=True)
    var = jnp.mean((x - mean) ** 2, axis=-1, keepdims=True)
    return (x - mean) * jax.lax.rsqrt(var + eps) * g + b


# ----------------------------- Pallas kernels -----------------------------

def _embed_ln_kernel(x_ref, g_ref, b_ref, o_ref, *, eps):
    x = x_ref[...].astype(jnp.float32)
    o_ref[...] = _layernorm(x, g_ref[...], b_ref[...], eps).astype(o_ref.dtype)


def _encoder_layer_kernel(x_ref, mask_ref,
                          qkv_w_ref, qkv_b_ref, wo_ref, bo_ref,
                          ln1_g_ref, ln1_b_ref,
                          wi_ref, bi_ref, wo2_ref, bo2_ref,
                          ln2_g_ref, ln2_b_ref,
                          o_ref, *, B, S, heads, dh, eps):
    """Full RoBERTa encoder layer, fully fused: QKV -> MHA -> out-proj -> LN -> FFN -> LN."""
    H = heads * dh
    x = x_ref[...].astype(jnp.float32)                      # (B*S, H)
    add_mask = mask_ref[...].astype(jnp.float32)            # (B, S) additive key mask

    # ---- fused QKV projection: one lane-dense (B*S, 3H) matmul ----
    qkv = jnp.dot(x, qkv_w_ref[...], preferred_element_type=jnp.float32) + qkv_b_ref[...]
    wo = wo_ref[...]                                        # (H, H)

    # ---- multi-head self-attention + output projection, everything in-register ----
    scale = 1.0 / float(dh) ** 0.5
    batch_rows = []
    for b in range(B):                                      # static unroll; B*heads is tiny
        r0, r1 = b * S, (b + 1) * S
        m_b = add_mask[b:b + 1, :]                          # (1, S)
        acc_b = None
        for h in range(heads):
            c0, c1 = h * dh, (h + 1) * dh
            q = qkv[r0:r1, c0:c1]                           # (S, dh)
            k = qkv[r0:r1, H + c0:H + c1]                   # (S, dh)
            v = qkv[r0:r1, 2 * H + c0:2 * H + c1]           # (S, dh)
            s = jnp.dot(q, k.T, preferred_element_type=jnp.float32) * scale + m_b
            s = s - jnp.max(s, axis=-1, keepdims=True)
            e = jnp.exp(s)
            p = e / jnp.sum(e, axis=-1, keepdims=True)
            ctx = jnp.dot(p, v, preferred_element_type=jnp.float32)                   # (S, dh)
            # Fold the per-head output projection in directly: sum_h ctx_h @ Wo[h]
            contrib = jnp.dot(ctx, wo[c0:c1, :], preferred_element_type=jnp.float32)  # (S, H)
            acc_b = contrib if acc_b is None else acc_b + contrib
        batch_rows.append(acc_b)
    attn = jnp.concatenate(batch_rows, axis=0) + bo_ref[...]   # (B*S, H)

    # ---- residual + LayerNorm 1 ----
    h1 = _layernorm(attn + x, ln1_g_ref[...], ln1_b_ref[...], eps)

    # ---- feed-forward (exact GELU) + residual + LayerNorm 2 ----
    inter = _gelu_exact(jnp.dot(h1, wi_ref[...], preferred_element_type=jnp.float32) + bi_ref[...])
    ffn = jnp.dot(inter, wo2_ref[...], preferred_element_type=jnp.float32) + bo2_ref[...]
    o_ref[...] = _layernorm(ffn + h1, ln2_g_ref[...], ln2_b_ref[...], eps).astype(o_ref.dtype)


def _head_kernel(cls_ref, pw_ref, pb_ref, fw_ref, fb_ref, o_ref, *, kind, n_valid):
    """Fused pooler (tanh dense on CLS) + fc (padded to 128 lanes) + optional sigmoid/softmax."""
    cls = cls_ref[...].astype(jnp.float32)                  # (B, H)
    pooled = jnp.tanh(jnp.dot(cls, pw_ref[...], preferred_element_type=jnp.float32) + pb_ref[...])
    logits = jnp.dot(pooled, fw_ref[...], preferred_element_type=jnp.float32) + fb_ref[...]  # (B, C_pad)
    if kind == "softmax":
        col = jax.lax.broadcasted_iota(jnp.int32, logits.shape, 1)
        masked = jnp.where(col < n_valid, logits, -1e30)    # exclude padded lanes from softmax
        masked = masked - jnp.max(masked, axis=-1, keepdims=True)
        e = jnp.exp(masked)
        logits = e / jnp.sum(e, axis=-1, keepdims=True)
    elif kind == "sigmoid":
        logits = jax.nn.sigmoid(logits)
    o_ref[...] = logits.astype(o_ref.dtype)


# --------------------------- parameter creation ---------------------------

def init_params(key, vocab, max_pos, hidden, heads, intermediate, layers, candidates, c_pad=128):
    ks = iter(jax.random.split(key, 64))
    nrm = lambda shp, s=0.02: jax.random.normal(next(ks), shp, jnp.float32) * s
    ones = lambda shp: jnp.ones(shp, jnp.float32)
    zeros = lambda shp: jnp.zeros(shp, jnp.float32)

    fc_w = zeros((hidden, c_pad)).at[:, :candidates].set(nrm((hidden, candidates)))
    p = {
        "num_heads": heads,
        "candidates": candidates,
        "word_emb": nrm((vocab, hidden)),
        "pos_emb": nrm((max_pos, hidden)),
        "type_emb": nrm((1, hidden)),
        "emb_ln_g": ones((1, hidden)),
        "emb_ln_b": zeros((1, hidden)),
        "layers": [],
        "pool_w": nrm((hidden, hidden)),
        "pool_b": zeros((1, hidden)),
        "fc_w": fc_w,                          # padded to 128 lanes; real cols = candidates
        "fc_b": zeros((1, c_pad)),
    }
    for _ in range(layers):
        p["layers"].append({
            "qkv_w": nrm((hidden, 3 * hidden)),    # fused Wq | Wk | Wv
            "qkv_b": zeros((1, 3 * hidden)),
            "wo": nrm((hidden, hidden)), "bo": zeros((1, hidden)),
            "ln1_g": ones((1, hidden)), "ln1_b": zeros((1, hidden)),
            "wi": nrm((hidden, intermediate)), "bi": zeros((1, intermediate)),
            "wo2": nrm((intermediate, hidden)), "bo2": zeros((1, hidden)),
            "ln2_g": ones((1, hidden)), "ln2_b": zeros((1, hidden)),
        })
    return p


# ------------------------------ forward pass -------------------------------

def my_roberta_forward(params, input_ids, attention_mask, forward_func="none"):
    B, S = input_ids.shape
    H = params["word_emb"].shape[1]
    heads = params["num_heads"]
    dh = H // heads
    candidates = params["candidates"]
    pad_idx = 1  # RoBERTa padding_idx

    # Embeddings (gathers stay in XLA glue). Position ids follow HF
    # create_position_ids_from_input_ids: derived from non-padding tokens.
    nonpad = (input_ids != pad_idx).astype(jnp.int32)
    pos_ids = jnp.cumsum(nonpad, axis=1) * nonpad + pad_idx
    emb = (params["word_emb"][input_ids]
           + params["pos_emb"][pos_ids]
           + params["type_emb"][0][None, None, :])
    x = emb.reshape(B * S, H).astype(jnp.float32)

    # Embedding LayerNorm (no zero residual tensor).
    x = pl.pallas_call(
        functools.partial(_embed_ln_kernel, eps=1e-5),
        out_shape=jax.ShapeDtypeStruct((B * S, H), jnp.float32),
    )(x, params["emb_ln_g"], params["emb_ln_b"])

    # Additive attention mask over keys, shared by every layer and head: (B, S).
    add_mask = (1.0 - attention_mask.astype(jnp.float32)) * -1e9

    layer_call = pl.pallas_call(
        functools.partial(_encoder_layer_kernel, B=B, S=S, heads=heads, dh=dh, eps=1e-5),
        out_shape=jax.ShapeDtypeStruct((B * S, H), jnp.float32),
    )
    for lyr in params["layers"]:
        x = layer_call(x, add_mask,
                       lyr["qkv_w"], lyr["qkv_b"], lyr["wo"], lyr["bo"],
                       lyr["ln1_g"], lyr["ln1_b"],
                       lyr["wi"], lyr["bi"], lyr["wo2"], lyr["bo2"],
                       lyr["ln2_g"], lyr["ln2_b"])

    # Pooler on first token + fc + optional sigmoid/softmax, fused into one kernel.
    cls = x.reshape(B, S, H)[:, 0, :]
    c_pad = params["fc_w"].shape[1]
    logits = pl.pallas_call(
        functools.partial(_head_kernel, kind=forward_func, n_valid=candidates),
        out_shape=jax.ShapeDtypeStruct((B, c_pad), jnp.float32),
    )(cls, params["pool_w"], params["pool_b"], params["fc_w"], params["fc_b"])
    return logits[:, :candidates]


# ---------------------------------- main -----------------------------------

if __name__ == "__main__":
    B, S = 2, 8
    HIDDEN, HEADS, INTER, LAYERS = 64, 4, 128, 2
    VOCAB, CANDIDATES = 100, 8
    MAX_POS = S + 2

    key = jax.random.PRNGKey(0)
    kp, kid = jax.random.split(key)
    params = init_params(kp, VOCAB, MAX_POS, HIDDEN, HEADS, INTER, LAYERS, CANDIDATES)

    input_ids = jax.random.randint(kid, (B, S), 2, VOCAB, dtype=jnp.int32)
    attention_mask = jnp.ones((B, S), jnp.int32).at[1, S - 2:].set(0)

    out_none = my_roberta_forward(params, input_ids, attention_mask, forward_func="none")
    out_soft = my_roberta_forward(params, input_ids, attention_mask, forward_func="softmax")
    out_sig = my_roberta_forward(params, input_ids, attention_mask, forward_func="sigmoid")
    jax.block_until_ready((out_none, out_soft, out_sig))

    assert out_none.shape == (B, CANDIDATES)
    assert out_soft.shape == (B, CANDIDATES)
    assert out_sig.shape == (B, CANDIDATES)
    assert bool(jnp.all(jnp.isfinite(out_none)))
    assert bool(jnp.allclose(jnp.sum(out_soft, axis=-1), 1.0, atol=1e-5))
    print("KERNEL_OK")
</pallas_src>

<mosaic_0001>
module attributes {stable_mosaic.version = 11 : i64} {
  func.func @_embed_ln_kernel(%arg0: memref<16x64xf32, #tpu.memory_space<vmem>>, %arg1: memref<1x64xf32, #tpu.memory_space<vmem>>, %arg2: memref<1x64xf32, #tpu.memory_space<vmem>>, %arg3: memref<16x64xf32, #tpu.memory_space<vmem>>) attributes {dimension_semantics = [], scalar_prefetch = 0 : i64, scratch_operands = 0 : i64, tpu.core_type = #tpu.core_type<tc>} {
    %c0 = arith.constant 0 : index
    %c0_0 = arith.constant 0 : index
    %0 = vector.load %arg0[%c0, %c0_0] : memref<16x64xf32, #tpu.memory_space<vmem>>, vector<16x64xf32>
    %c0_1 = arith.constant 0 : index
    %c0_2 = arith.constant 0 : index
    %1 = vector.load %arg1[%c0_1, %c0_2] : memref<1x64xf32, #tpu.memory_space<vmem>>, vector<1x64xf32>
    %c0_3 = arith.constant 0 : index
    %c0_4 = arith.constant 0 : index
    %2 = vector.load %arg2[%c0_3, %c0_4] : memref<1x64xf32, #tpu.memory_space<vmem>>, vector<1x64xf32>
    %cst = arith.constant dense<0.000000e+00> : vector<16xf32>
    %3 = vector.multi_reduction <add>, %0, %cst [1] : vector<16x64xf32> to vector<16xf32>
    %4 = vector.shape_cast %3 : vector<16xf32> to vector<16x1xf32>
    %cst_5 = arith.constant 6.400000e+01 : f32
    %5 = vector.broadcast %cst_5 : f32 to vector<16x1xf32>
    %6 = arith.divf %4, %5 : vector<16x1xf32>
    %7 = vector.broadcast %6 : vector<16x1xf32> to vector<16x64xf32>
    %8 = arith.subf %0, %7 : vector<16x64xf32>
    %9 = arith.mulf %8, %8 : vector<16x64xf32>
    %cst_6 = arith.constant dense<0.000000e+00> : vector<16xf32>
    %10 = vector.multi_reduction <add>, %9, %cst_6 [1] : vector<16x64xf32> to vector<16xf32>
    %11 = vector.shape_cast %10 : vector<16xf32> to vector<16x1xf32>
    %cst_7 = arith.constant 6.400000e+01 : f32
    %12 = vector.broadcast %cst_7 : f32 to vector<16x1xf32>
    %13 = arith.divf %11, %12 : vector<16x1xf32>
    %14 = vector.broadcast %6 : vector<16x1xf32> to vector<16x64xf32>
    %15 = arith.subf %0, %14 : vector<16x64xf32>
    %cst_8 = arith.constant 9.99999974E-6 : f32
    %16 = vector.broadcast %cst_8 : f32 to vector<16x1xf32>
    %17 = arith.addf %13, %16 : vector<16x1xf32>
    %18 = math.rsqrt %17 : vector<16x1xf32>
    %19 = vector.broadcast %18 : vector<16x1xf32> to vector<16x64xf32>
    %20 = arith.mulf %15, %19 : vector<16x64xf32>
    %21 = vector.broadcast %1 : vector<1x64xf32> to vector<16x64xf32>
    %22 = arith.mulf %20, %21 : vector<16x64xf32>
    %23 = vector.broadcast %2 : vector<1x64xf32> to vector<16x64xf32>
    %24 = arith.addf %22, %23 : vector<16x64xf32>
    %c0_9 = arith.constant 0 : index
    %c0_10 = arith.constant 0 : index
    %25 = vector.load %arg3[%c0_9, %c0_10] : memref<16x64xf32, #tpu.memory_space<vmem>>, vector<16x64xf32>
    tpu.vector_store %arg3[%c0_9, %c0_10], %24 {strides = array<i32>} : memref<16x64xf32, #tpu.memory_space<vmem>>, vector<16x64xf32>,
    return
  }
}

</mosaic_0001>

<llo_original>
// kernel: tpu_custom_call.1
$region0: #{tpu_custom_call.1}
  #allocation0 [shape = 'u32[]', space=smem, size = 0x4, offset = 0x4, fixed_abs, tag = 'smem constant byte address 0x4 - core index']
  #allocation1 [shape = 'u32[144,128]{1,0:T(1,128)}', space=vmem, size = 0x12000, scoped, tag = 'internal scratch']
  %s0 = inlined_call_operand.hbm [shape: f32[16,64], index: 0, kind: input, shape index: {}]
  %s1 = inlined_call_operand.vmem [shape: f32[1,64], index: 1, kind: input, shape index: {}]
  %s2 = inlined_call_operand.vmem [shape: f32[1,64], index: 2, kind: input, shape index: {}]
  %s3 = inlined_call_operand.hbm [shape: f32[16,64], index: 3, kind: output, shape index: {}]
  %s4 = sld [smem:[#allocation0]]
  $region26: #{tpu_custom_call.1} parent=0
    _
  %s6 = ssub.s32 1, %s4
  %s7 = scalar_select 0, %s6, %s4
  $region1: #{tpu_custom_call.1} parent=0
    #allocation2 [shape = 'u8[8192]{0}', space=vmem, size = 0x2000, scoped, tag = 'input window, operand 0, single buffered']
    #allocation3 [shape = 's32[1]{0}', space=sflag, size = 0x4, scoped, tag = 'scoped memory for tpu_custom_call.1']
    #allocation4 [shape = 's32[1]{0}', space=sflag, size = 0x4, scoped, tag = 'scoped memory for tpu_custom_call.1']
    #allocation5 [shape = 'u8[8192]{0}', space=vmem, size = 0x2000, scoped, tag = 'output window, operand 0, single buffered']
    %8 = vsyncpa [#allocation3], 0
    %9 = vsyncpa [#allocation4], 0
    // Predicated region
    $region2: #{tpu_custom_call.1} parent=1 // pred_check
      _
    $region3: #{tpu_custom_call.1} parent=1 // pred_check_branch
      %11 = sbr.rel (0) target = $region5
    $region4: #{tpu_custom_call.1} parent=1 // pred_region
      %s13 = ssub.s32 256, 256
      %14 = vsyncadd [#allocation3], %s13
      %s15 = sshll.u32 [#allocation2], 4
      %s16 = int_to_ptr.vmem [resolvable:$true] %s15
      %21 = dma.hbm_to_vmem [thread:$0]  %s0, 256, %s16, [#allocation3], 128, 128, 8
    $region5: #{tpu_custom_call.1} parent=1 // pred_fallthru
      _
    // Predicated region
    $region6: #{tpu_custom_call.1} parent=1 // pred_check
      _
    $region7: #{tpu_custom_call.1} parent=1 // pred_check_branch
      %23 = sbr.rel (0) target = $region9
    $region8: #{tpu_custom_call.1} parent=1 // pred_region
      _
    $region9: #{tpu_custom_call.1} parent=1 // pred_fallthru
      _
    // Predicated region
    $region10: #{tpu_custom_call.1} parent=1 // pred_check
      _
    $region11: #{tpu_custom_call.1} parent=1 // pred_check_branch
      %25 = sbr.rel (0) target = $region13
    $region12: #{tpu_custom_call.1} parent=1 // pred_region
      _
    $region13: #{tpu_custom_call.1} parent=1 // pred_fallthru
      _
    // Predicated region
    $region14: #{tpu_custom_call.1} parent=1 // pred_check
      _
    $region15: #{tpu_custom_call.1} parent=1 // pred_check_branch
      %27 = sbr.rel (0) target = $region17
    $region16: #{tpu_custom_call.1} parent=1 // pred_region
      %28 = dma.done [#allocation3], 256
    $region17: #{tpu_custom_call.1} parent=1 // pred_fallthru
      _
    %v29 = vld [vmem:[#allocation2] sm:$0xff]
    %v30 = vld [vmem:[#allocation2 + $0x8] sm:$0xff]
    %v31 = vld [vmem:[%s1] sm:$0x1]
    %v32 = vld [vmem:[%s2] sm:$0x1]
    %vm33 = vcmask 523264
    %v34 = vsel %vm33, %v29, 0.0
    %35 = vadd.xlane.f32.xlu0 %v34
    %v36 = vpop.xlane.xlu0 %35
    %v37 = vsel %vm33, %v30, 0.0
    %38 = vadd.xlane.f32.xlu0 %v37
    %v39 = vpop.xlane.xlu0 %38
    %v40 = vrcp.pop 64.0
    %v41 = vmul.f32 %v36, %v40
    %v42 = vmul.f32 %v39, %v40
    %v43 = vsub.f32 %v29, %v41
    %v44 = vsub.f32 %v30, %v42
    %v45 = vmul.f32 %v43, %v43
    %v46 = vmul.f32 %v44, %v44
    %v47 = vsel %vm33, %v45, 0.0
    %48 = vadd.xlane.f32.xlu0 %v47
    %v49 = vpop.xlane.xlu0 %48
    %v50 = vsel %vm33, %v46, 0.0
    %51 = vadd.xlane.f32.xlu0 %v50
    %v52 = vpop.xlane.xlu0 %51
    %v53 = vmul.f32 %v49, %v40
    %v54 = vmul.f32 %v52, %v40
    %v55 = vadd.f32 %v53, 1e-05
    %v56 = vadd.f32 %v54, 1e-05
    %v57 = vrsqrt.pop %v55
    %v58 = vrsqrt.pop %v56
    %v59 = vmul.f32 %v43, %v57
    %v60 = vmul.f32 %v44, %v58
    %v62 = vlaneseq
    %v63 = vshrl.u32 %v62, 7
    %v64 = vsub.s32 0, %v63
    %v65 = vrot.slane %v31, %v64
    %v67 = vmul.f32 %v59, %v65
    %v68 = vmul.f32 %v60, %v65
    %v70 = vlaneseq
    %v71 = vshrl.u32 %v70, 7
    %v72 = vsub.s32 0, %v71
    %v73 = vrot.slane %v32, %v72
    %v75 = vadd.f32 %v67, %v73
    %v76 = vadd.f32 %v68, %v73
    %77 = vst.msk [vmem:[#allocation5] sm:$0xff] %vm33, %v75
    %78 = vst.msk [vmem:[#allocation5 + $0x8] sm:$0xff] %vm33, %v76
    // Predicated region
    $region18: #{tpu_custom_call.1} parent=1 // pred_check
      _
    $region19: #{tpu_custom_call.1} parent=1 // pred_check_branch
      %80 = sbr.rel (0) target = $region21
    $region20: #{tpu_custom_call.1} parent=1 // pred_region
      %s82 = ssub.s32 256, 256
      %83 = vsyncadd [#allocation4], %s82
      %s84 = sshll.u32 [#allocation5], 4
      %s85 = int_to_ptr.vmem [resolvable:$true] %s84
      %90 = dma.vmem_to_hbm [thread:$0]  %s85, 256, %s3, [#allocation4], 128, 128, 8
    $region21: #{tpu_custom_call.1} parent=1 // pred_fallthru
      _
    // Predicated region
    $region22: #{tpu_custom_call.1} parent=1 // pred_check
      _
    $region23: #{tpu_custom_call.1} parent=1 // pred_check_branch
      %92 = sbr.rel (0) target = $region25
    $region24: #{tpu_custom_call.1} parent=1 // pred_region
      %93 = dma.done [#allocation4], 256
    $region25: #{tpu_custom_call.1} parent=1 // pred_fallthru
      _
    %94 = vsyncpa [#allocation3], 1
    %95 = vsyncpa [#allocation4], 1

</llo_original>
